<compile_context>
chip_gen: v6e
topology: v6e:2x2x1
jax: 0.10.0
libtpu: 0.0.40
codegen_flags: <defaults>
</compile_context>

<pallas_src>
import jax
import jax.numpy as jnp
from jax import lax
from jax.experimental import pallas as pl
from jax.experimental.pallas import tpu as pltpu


# ----------------------------------------------------------------------------
# Kernels
# ----------------------------------------------------------------------------
_DN = (((1,), (1,)), ((), ()))   # contract last dims: x @ W^T with torch layout


def _ffn_resident_kernel(x_ref, w1_ref, b1_ref, w2_ref, b2_ref, o_ref):
    # fc1: (tm, d_model) x (d_ff, d_model)^T -> (tm, d_ff), f32 MXU accumulate.
    h = lax.dot_general(x_ref[...], w1_ref[...], dimension_numbers=_DN,
                        preferred_element_type=jnp.float32)
    h = jnp.maximum(h + b1_ref[...].astype(jnp.float32), 0.0)
    # Intentional downcast of activations to the weight dtype (bf16) for MXU.
    y = lax.dot_general(h.astype(w2_ref.dtype), w2_ref[...],
                        dimension_numbers=_DN,
                        preferred_element_type=jnp.float32)
    o_ref[...] = (y + b2_ref[...].astype(jnp.float32)).astype(o_ref.dtype)


def _ffn_streamed_kernel(x_ref, w1_ref, b1_ref, w2_ref, b2_ref, o_ref, acc_ref):
    f = pl.program_id(1)

    @pl.when(f == 0)
    def _():
        acc_ref[...] = jnp.zeros_like(acc_ref)

    # fc1 slice: (tm, d_model) x (tf, d_model)^T -> (tm, tf)
    h = lax.dot_general(x_ref[...], w1_ref[...], dimension_numbers=_DN,
                        preferred_element_type=jnp.float32)
    h = jnp.maximum(h + b1_ref[...].astype(jnp.float32), 0.0)
    # fc2 partial: (tm, tf) x (d_model, tf)^T -> (tm, d_model) accumulated f32.
    acc_ref[...] += lax.dot_general(h.astype(w2_ref.dtype), w2_ref[...],
                                    dimension_numbers=_DN,
                                    preferred_element_type=jnp.float32)

    @pl.when(f == pl.num_programs(1) - 1)
    def _():
        o_ref[...] = (acc_ref[...] + b2_ref[...].astype(jnp.float32)
                      ).astype(o_ref.dtype)


# ----------------------------------------------------------------------------
# Wrapper
# ----------------------------------------------------------------------------
def _round_up(n, m):
    return ((n + m - 1) // m) * m


def _vmem_capacity_bytes():
    try:
        return int(pltpu.get_tpu_info().vmem_capacity_bytes)
    except Exception:
        return 64 * 1024 * 1024   # conservative: v7x per-TC physical VMEM


def position_wise_feed_forward(x, w1, b1, w2, b2, *,
                               block_m=512, block_ff=1024,
                               use_bf16=True, force_streamed=False,
                               interpret=False):
    """Fused position-wise FFN.

    x : (..., d_model);  torch nn.Linear layouts:
        w1: (d_ff, d_model), b1: (d_ff,), w2: (d_model, d_ff), b2: (d_model,).
    Returns the same shape/dtype as x.  Matmuls run with bf16 operands and f32
    accumulation when use_bf16=True (the documented accuracy contract).
    """
    orig_shape = x.shape
    out_dtype = x.dtype
    d_model = orig_shape[-1]
    d_ff = w1.shape[0]
    assert w1.shape == (d_ff, d_model)
    assert w2.shape == (d_model, d_ff)
    assert b1.shape == (d_ff,) and b2.shape == (d_model,)

    M = x.size // d_model
    x2 = x.reshape(M, d_model)

    compute_dtype = jnp.bfloat16 if use_bf16 else x.dtype
    x2 = x2.astype(compute_dtype)
    w1c = w1.astype(compute_dtype)           # torch layout kept: no HBM transpose
    w2c = w2.astype(compute_dtype)
    b1r = b1.reshape(1, d_ff).astype(jnp.float32)
    b2r = b2.reshape(1, d_model).astype(jnp.float32)

    itemsize = jnp.dtype(compute_dtype).itemsize
    out_itemsize = jnp.dtype(out_dtype).itemsize
    sub = 16 if itemsize == 2 else 8          # sublane multiple for the M tile

    vmem_cap = _vmem_capacity_bytes()
    budget = int(vmem_cap * 0.6)              # tile working-set budget
    vmem_limit = int(vmem_cap * 0.85)         # explicit scoped-VMEM limit

    # ---- tile selection -----------------------------------------------------
    tm = min(block_m, _round_up(M, sub))
    tm = max(sub, (tm // sub) * sub)

    def resident_fp(tm_):
        # 2x on everything (double-buffer conservatism) + in-kernel (tm, d_ff)
        # intermediates (f32 h + bf16 copy).
        return (2 * (tm_ * d_model * itemsize
                     + d_ff * d_model * itemsize
                     + d_model * d_ff * itemsize
                     + d_ff * 4 + d_model * 4
                     + tm_ * d_model * out_itemsize)
                + tm_ * d_ff * (4 + itemsize))

    def streamed_fp(tm_, tf_):
        return (2 * (tm_ * d_model * itemsize
                     + tf_ * d_model * itemsize
                     + d_model * tf_ * itemsize
                     + tf_ * 4 + d_model * 4
                     + tm_ * d_model * out_itemsize)
                + tm_ * d_model * 4                 # f32 accumulator
                + tm_ * tf_ * (4 + itemsize))       # in-kernel intermediates

    use_resident = (not force_streamed) and resident_fp(sub) <= budget

    if use_resident:
        while tm > sub and resident_fp(tm) > budget:
            tm = max(sub, ((tm // 2) // sub) * sub)
        Mp = _round_up(M, tm)
        if Mp != M:
            x2 = jnp.pad(x2, ((0, Mp - M), (0, 0)))
        grid = (Mp // tm,)
        # TODO(synk): for v7x dual-TC, prefer tm such that Mp//tm is even.
        out2 = pl.pallas_call(
            _ffn_resident_kernel,
            out_shape=jax.ShapeDtypeStruct((Mp, d_model), out_dtype),
            grid_spec=pltpu.PrefetchScalarGridSpec(
                num_scalar_prefetch=0,
                grid=grid,
                in_specs=[
                    pl.BlockSpec((tm, d_model), lambda i: (i, 0)),     # x tile
                    pl.BlockSpec((d_ff, d_model), lambda i: (0, 0)),   # W1 resident
                    pl.BlockSpec((1, d_ff), lambda i: (0, 0)),         # b1
                    pl.BlockSpec((d_model, d_ff), lambda i: (0, 0)),   # W2 resident
                    pl.BlockSpec((1, d_model), lambda i: (0, 0)),      # b2
                ],
                out_specs=pl.BlockSpec((tm, d_model), lambda i: (i, 0)),
            ),
            compiler_params=pltpu.CompilerParams(
                dimension_semantics=("parallel",),
                vmem_limit_bytes=vmem_limit),
            interpret=interpret,
        )(x2, w1c, b1r, w2c, b2r)
    else:
        tf = min(block_ff, _round_up(d_ff, 128))
        tf = max(128, (tf // 128) * 128)
        while streamed_fp(tm, tf) > budget and (tm > sub or tf > 128):
            if tf >= tm and tf > 128:
                tf = max(128, ((tf // 2) // 128) * 128)
            elif tm > sub:
                tm = max(sub, ((tm // 2) // sub) * sub)
            else:
                break
        Mp = _round_up(M, tm)
        Fp = _round_up(d_ff, tf)
        if Mp != M:
            x2 = jnp.pad(x2, ((0, Mp - M), (0, 0)))
        if Fp != d_ff:
            # Zero-padded d_ff columns contribute relu(0+0)*0 == 0 exactly.
            w1c = jnp.pad(w1c, ((0, Fp - d_ff), (0, 0)))
            w2c = jnp.pad(w2c, ((0, 0), (0, Fp - d_ff)))
            b1r = jnp.pad(b1r, ((0, 0), (0, Fp - d_ff)))
        grid = (Mp // tm, Fp // tf)
        out2 = pl.pallas_call(
            _ffn_streamed_kernel,
            out_shape=jax.ShapeDtypeStruct((Mp, d_model), out_dtype),
            grid_spec=pltpu.PrefetchScalarGridSpec(
                num_scalar_prefetch=0,
                grid=grid,
                in_specs=[
                    pl.BlockSpec((tm, d_model), lambda i, f: (i, 0)),   # x tile
                    pl.BlockSpec((tf, d_model), lambda i, f: (f, 0)),   # W1 slice
                    pl.BlockSpec((1, tf),       lambda i, f: (0, f)),   # b1 slice
                    pl.BlockSpec((d_model, tf), lambda i, f: (0, f)),   # W2 slice
                    pl.BlockSpec((1, d_model),  lambda i, f: (0, 0)),   # b2
                ],
                out_specs=pl.BlockSpec((tm, d_model), lambda i, f: (i, 0)),
                scratch_shapes=[pltpu.VMEM((tm, d_model), jnp.float32)],
            ),
            compiler_params=pltpu.CompilerParams(
                dimension_semantics=("parallel", "arbitrary"),
                vmem_limit_bytes=vmem_limit),
            interpret=interpret,
        )(x2, w1c, b1r, w2c, b2r)

    return out2[:M].reshape(orig_shape)


# ----------------------------------------------------------------------------
# References
# ----------------------------------------------------------------------------
def _ffn_ref_f32(x, w1, b1, w2, b2):
    """Pure-f32 reference mirroring the torch forward."""
    h = jnp.maximum(jnp.dot(x, w1.T, precision=lax.Precision.HIGHEST) + b1, 0.0)
    return jnp.dot(h, w2.T, precision=lax.Precision.HIGHEST) + b2


def _ffn_ref_bf16(x, w1, b1, w2, b2):
    """Exact emulation of the kernel's bf16-operand / f32-accumulate contract."""
    xb = x.astype(jnp.bfloat16).astype(jnp.float32)
    w1b = w1.astype(jnp.bfloat16).astype(jnp.float32)
    w2b = w2.astype(jnp.bfloat16).astype(jnp.float32)
    h = jnp.dot(xb, w1b.T, precision=lax.Precision.HIGHEST) + b1
    h = jnp.maximum(h, 0.0).astype(jnp.bfloat16).astype(jnp.float32)
    return jnp.dot(h, w2b.T, precision=lax.Precision.HIGHEST) + b2


if __name__ == "__main__":
    key = jax.random.PRNGKey(0)
    k1, k2, k3, k4, k5 = jax.random.split(key, 5)

    batch, seq, d_model, d_ff = 2, 64, 128, 512

    x = jax.random.normal(k1, (batch, seq, d_model), dtype=jnp.float32)
    # torch nn.Linear layout: weight is (out_features, in_features)
    w1 = jax.random.normal(k2, (d_ff, d_model), dtype=jnp.float32) * (d_model ** -0.5)
    b1 = jax.random.normal(k3, (d_ff,), dtype=jnp.float32) * 0.1
    w2 = jax.random.normal(k4, (d_model, d_ff), dtype=jnp.float32) * (d_ff ** -0.5)
    b2 = jax.random.normal(k5, (d_model,), dtype=jnp.float32) * 0.1

    # Path 1: resident weights (they are tiny here, so fully VMEM-resident).
    out_res = jax.block_until_ready(position_wise_feed_forward(x, w1, b1, w2, b2))

    # Path 2: streamed / accumulator path forced, so the (M, d_ff) grid with
    # the trailing reduction axis is exercised too ((2, 2) grid here).
    out_str = jax.block_until_ready(
        position_wise_feed_forward(x, w1, b1, w2, b2,
                                   block_m=64, block_ff=256,
                                   force_streamed=True))

    ref32 = _ffn_ref_f32(x, w1, b1, w2, b2)
    ref16 = _ffn_ref_bf16(x, w1, b1, w2, b2)

    for out in (out_res, out_str):
        assert out.shape == ref32.shape and out.dtype == x.dtype
        tight = float(jnp.max(jnp.abs(out - ref16)))   # same bf16 contract
        assert tight < 5e-3, tight
        loose = float(jnp.max(jnp.abs(out - ref32)))   # bf16-vs-f32 accuracy
        assert loose < 1e-1, loose

    print("KERNEL_OK")
</pallas_src>

<mosaic_0001>
module attributes {stable_mosaic.version = 11 : i64} {
  func.func @_ffn_resident_kernel(%arg0: i32, %arg1: memref<128x128xbf16, #tpu.memory_space<vmem>>, %arg2: memref<512x128xbf16, #tpu.memory_space<vmem>>, %arg3: memref<1x512xf32, #tpu.memory_space<vmem>>, %arg4: memref<128x512xbf16, #tpu.memory_space<vmem>>, %arg5: memref<1x128xf32, #tpu.memory_space<vmem>>, %arg6: memref<128x128xf32, #tpu.memory_space<vmem>>) attributes {dimension_semantics = [#tpu.dimension_semantics<parallel>], iteration_bounds = array<i64: 1>, scalar_prefetch = 0 : i64, scratch_operands = 0 : i64, tpu.core_type = #tpu.core_type<tc>, window_params = [{transform_indices = @transform_0, window_bounds = array<i64: 128, 128>}, {pipeline_mode = #tpu.pipeline_mode<synchronous>, transform_indices = @transform_1, window_bounds = array<i64: 512, 128>}, {pipeline_mode = #tpu.pipeline_mode<synchronous>, transform_indices = @transform_2, window_bounds = array<i64: 1, 512>}, {pipeline_mode = #tpu.pipeline_mode<synchronous>, transform_indices = @transform_3, window_bounds = array<i64: 128, 512>}, {pipeline_mode = #tpu.pipeline_mode<synchronous>, transform_indices = @transform_4, window_bounds = array<i64: 1, 128>}, {transform_indices = @transform_5, window_bounds = array<i64: 128, 128>}]} {
    %c0 = arith.constant 0 : index
    %c0_0 = arith.constant 0 : index
    %0 = vector.load %arg1[%c0, %c0_0] : memref<128x128xbf16, #tpu.memory_space<vmem>>, vector<128x128xbf16>
    %c0_1 = arith.constant 0 : index
    %c0_2 = arith.constant 0 : index
    %1 = vector.load %arg2[%c0_1, %c0_2] : memref<512x128xbf16, #tpu.memory_space<vmem>>, vector<512x128xbf16>
    %cst = arith.constant dense<0.000000e+00> : vector<128x512xf32>
    %2 = tpu.matmul %0, %1, %cst {dimension_numbers = #tpu.dot_dimension_numbers<[1], [1], [0], [0], [0, 0, 1, 0], [], []>} : vector<128x128xbf16>, vector<512x128xbf16>, vector<128x512xf32> -> vector<128x512xf32>
    %c0_3 = arith.constant 0 : index
    %c0_4 = arith.constant 0 : index
    %3 = vector.load %arg3[%c0_3, %c0_4] : memref<1x512xf32, #tpu.memory_space<vmem>>, vector<1x512xf32>
    %4 = vector.broadcast %3 : vector<1x512xf32> to vector<128x512xf32>
    %5 = arith.addf %2, %4 : vector<128x512xf32>
    %cst_5 = arith.constant 0.000000e+00 : f32
    %6 = vector.broadcast %cst_5 : f32 to vector<128x512xf32>
    %7 = arith.maximumf %5, %6 : vector<128x512xf32>
    %8 = arith.truncf %7 : vector<128x512xf32> to vector<128x512xbf16>
    %c0_6 = arith.constant 0 : index
    %c0_7 = arith.constant 0 : index
    %9 = vector.load %arg4[%c0_6, %c0_7] : memref<128x512xbf16, #tpu.memory_space<vmem>>, vector<128x512xbf16>
    %cst_8 = arith.constant dense<0.000000e+00> : vector<128x128xf32>
    %10 = tpu.matmul %8, %9, %cst_8 {dimension_numbers = #tpu.dot_dimension_numbers<[1], [1], [0], [0], [0, 0, 1, 0], [], []>} : vector<128x512xbf16>, vector<128x512xbf16>, vector<128x128xf32> -> vector<128x128xf32>
    %c0_9 = arith.constant 0 : index
    %c0_10 = arith.constant 0 : index
    %11 = vector.load %arg5[%c0_9, %c0_10] : memref<1x128xf32, #tpu.memory_space<vmem>>, vector<1x128xf32>
    %12 = vector.broadcast %11 : vector<1x128xf32> to vector<128x128xf32>
    %13 = arith.addf %10, %12 : vector<128x128xf32>
    %c0_11 = arith.constant 0 : index
    %c0_12 = arith.constant 0 : index
    %14 = vector.load %arg6[%c0_11, %c0_12] : memref<128x128xf32, #tpu.memory_space<vmem>>, vector<128x128xf32>
    tpu.vector_store %arg6[%c0_11, %c0_12], %13 {strides = array<i32>} : memref<128x128xf32, #tpu.memory_space<vmem>>, vector<128x128xf32>,
    return
  }
  func.func @transform_0(%arg0: i32) -> (i32, i32) {
    %c0_i32 = arith.constant 0 : i32
    %c0_i32_0 = arith.constant 0 : i32
    return %arg0, %c0_i32 : i32, i32
  }
  func.func @transform_1(%arg0: i32) -> (i32, i32) {
    %c0_i32 = arith.constant 0 : i32
    %c0_i32_0 = arith.constant 0 : i32
    %c0_i32_1 = arith.constant 0 : i32
    return %c0_i32, %c0_i32_0 : i32, i32
  }
  func.func @transform_2(%arg0: i32) -> (i32, i32) {
    %c0_i32 = arith.constant 0 : i32
    %c0_i32_0 = arith.constant 0 : i32
    %c0_i32_1 = arith.constant 0 : i32
    return %c0_i32, %c0_i32_0 : i32, i32
  }
  func.func @transform_3(%arg0: i32) -> (i32, i32) {
    %c0_i32 = arith.constant 0 : i32
    %c0_i32_0 = arith.constant 0 : i32
    %c0_i32_1 = arith.constant 0 : i32
    return %c0_i32, %c0_i32_0 : i32, i32
  }
  func.func @transform_4(%arg0: i32) -> (i32, i32) {
    %c0_i32 = arith.constant 0 : i32
    %c0_i32_0 = arith.constant 0 : i32
    %c0_i32_1 = arith.constant 0 : i32
    return %c0_i32, %c0_i32_0 : i32, i32
  }
  func.func @transform_5(%arg0: i32) -> (i32, i32) {
    %c0_i32 = arith.constant 0 : i32
    %c0_i32_0 = arith.constant 0 : i32
    return %arg0, %c0_i32 : i32, i32
  }
}

</mosaic_0001>

<llo_original>
// kernel: tpu_custom_call.1
$region0: #{tpu_custom_call.1}
  #allocation0 [shape = 'u32[]', space=smem, size = 0x4, offset = 0x4, fixed_abs, tag = 'smem constant byte address 0x4 - core index']
  #allocation1 [shape = 'u32[144,128]{1,0:T(1,128)}', space=vmem, size = 0x12000, scoped, tag = 'internal scratch']
  %s0 = inlined_call_operand.hbm [shape: bf16[128,128], index: 0, kind: input, shape index: {}]
  %s1 = inlined_call_operand.hbm [shape: bf16[512,128], index: 1, kind: input, shape index: {}]
  %s2 = inlined_call_operand.hbm [shape: f32[1,512], index: 2, kind: input, shape index: {}]
  %s3 = inlined_call_operand.hbm [shape: bf16[128,512], index: 3, kind: input, shape index: {}]
  %s4 = inlined_call_operand.vmem [shape: f32[1,128], index: 4, kind: input, shape index: {}]
  %s5 = inlined_call_operand.hbm [shape: f32[128,128], index: 5, kind: output, shape index: {}]
  %s6 = sld [smem:[#allocation0]]
  $region46: #{tpu_custom_call.1} parent=0
    _
  %s8 = ssub.s32 1, %s6
  %s9 = scalar_select 0, %s8, %s6
  $region1: #{tpu_custom_call.1} parent=0
    #allocation2 [shape = 'u8[32768]{0}', space=vmem, size = 0x8000, scoped, tag = 'input window, operand 0, single buffered']
    #allocation3 [shape = 's32[1]{0}', space=sflag, size = 0x4, scoped, tag = 'scoped memory for tpu_custom_call.1']
    #allocation4 [shape = 's32[1]{0}', space=sflag, size = 0x4, scoped, tag = 'scoped memory for tpu_custom_call.1']
    #allocation5 [shape = 'u8[131072]{0}', space=vmem, size = 0x20000, scoped, tag = 'input window, operand 1, single buffered']
    #allocation6 [shape = 's32[1]{0}', space=sflag, size = 0x4, scoped, tag = 'scoped memory for tpu_custom_call.1']
    #allocation7 [shape = 'u8[2048]{0}', space=vmem, size = 0x800, scoped, tag = 'input window, operand 2, single buffered']
    #allocation8 [shape = 'u8[131072]{0}', space=vmem, size = 0x20000, scoped, tag = 'input window, operand 3, single buffered']
    #allocation9 [shape = 's32[1]{0}', space=sflag, size = 0x4, scoped, tag = 'scoped memory for tpu_custom_call.1']
    #allocation10 [shape = 'u8[65536]{0}', space=vmem, size = 0x10000, scoped, tag = 'output window, operand 0, single buffered']
    %10 = vsyncpa [#allocation3], 0
    %11 = vsyncpa [#allocation6], 0
    %12 = vsyncpa [#allocation9], 0
    %13 = vsyncpa [#allocation4], 0
    // Predicated region
    $region2: #{tpu_custom_call.1} parent=1 // pred_check
      _
    $region3: #{tpu_custom_call.1} parent=1 // pred_check_branch
      %15 = sbr.rel (0) target = $region5
    $region4: #{tpu_custom_call.1} parent=1 // pred_region
      %s17 = ssub.s32 1024, 1024
      %18 = vsyncadd [#allocation3], %s17
      %s19 = sshll.u32 [#allocation2], 4
      %s20 = int_to_ptr.vmem [resolvable:$true] %s19
      %25 = dma.hbm_to_vmem [thread:$0]  %s0, 1024, %s20, [#allocation3], 64, 64, 4
    $region5: #{tpu_custom_call.1} parent=1 // pred_fallthru
      _
    // Predicated region
    $region6: #{tpu_custom_call.1} parent=1 // pred_check
      _
    $region7: #{tpu_custom_call.1} parent=1 // pred_check_branch
      %27 = sbr.rel (0) target = $region9
    $region8: #{tpu_custom_call.1} parent=1 // pred_region
      %s29 = ssub.s32 4096, 4096
      %30 = vsyncadd [#allocation6], %s29
      %s31 = sshll.u32 [#allocation5], 4
      %s32 = int_to_ptr.vmem [resolvable:$true] %s31
      %37 = dma.hbm_to_vmem [thread:$0]  %s1, 4096, %s32, [#allocation6], 64, 64, 4
    $region9: #{tpu_custom_call.1} parent=1 // pred_fallthru
      _
    // Predicated region
    $region10: #{tpu_custom_call.1} parent=1 // pred_check
      _
    $region11: #{tpu_custom_call.1} parent=1 // pred_check_branch
      %39 = sbr.rel (0) target = $region13
    $region12: #{tpu_custom_call.1} parent=1 // pred_region
      %s41 = ssub.s32 64, 64
      %42 = vsyncadd [#allocation6], %s41
      %s44 = sshll.u32 [#allocation7], 4
      %s45 = int_to_ptr.vmem [resolvable:$true] %s44
      %47 = dma.hbm_to_vmem [thread:$0]  %s2, 64, %s45, [#allocation6]
    $region13: #{tpu_custom_call.1} parent=1 // pred_fallthru
      _
    // Predicated region
    $region14: #{tpu_custom_call.1} parent=1 // pred_check
      _
    $region15: #{tpu_custom_call.1} parent=1 // pred_check_branch
      %49 = sbr.rel (0) target = $region17
    $region16: #{tpu_custom_call.1} parent=1 // pred_region
      %s51 = ssub.s32 4096, 4096
      %52 = vsyncadd [#allocation9], %s51
      %s53 = sshll.u32 [#allocation8], 4
      %s54 = int_to_ptr.vmem [resolvable:$true] %s53
      %59 = dma.hbm_to_vmem [thread:$0]  %s3, 4096, %s54, [#allocation9], 256, 256, 16
    $region17: #{tpu_custom_call.1} parent=1 // pred_fallthru
      _
    // Predicated region
    $region18: #{tpu_custom_call.1} parent=1 // pred_check
      _
    $region19: #{tpu_custom_call.1} parent=1 // pred_check_branch
      %61 = sbr.rel (0) target = $region21
    $region20: #{tpu_custom_call.1} parent=1 // pred_region
      _
    $region21: #{tpu_custom_call.1} parent=1 // pred_fallthru
      _
    // Predicated region
    $region22: #{tpu_custom_call.1} parent=1 // pred_check
      _
    $region23: #{tpu_custom_call.1} parent=1 // pred_check_branch
      %63 = sbr.rel (0) target = $region25
    $region24: #{tpu_custom_call.1} parent=1 // pred_region
      %64 = dma.done [#allocation3], 1024
    $region25: #{tpu_custom_call.1} parent=1 // pred_fallthru
      _
    // Predicated region
    $region26: #{tpu_custom_call.1} parent=1 // pred_check
      _
    $region27: #{tpu_custom_call.1} parent=1 // pred_check_branch
      %66 = sbr.rel (0) target = $region29
    $region28: #{tpu_custom_call.1} parent=1 // pred_region
      %67 = dma.done [#allocation6], 4096
    $region29: #{tpu_custom_call.1} parent=1 // pred_fallthru
      _
    // Predicated region
    $region30: #{tpu_custom_call.1} parent=1 // pred_check
      _
    $region31: #{tpu_custom_call.1} parent=1 // pred_check_branch
      %69 = sbr.rel (0) target = $region33
    $region32: #{tpu_custom_call.1} parent=1 // pred_region
      %70 = dma.done [#allocation6], 64
    $region33: #{tpu_custom_call.1} parent=1 // pred_fallthru
      _
    // Predicated region
    $region34: #{tpu_custom_call.1} parent=1 // pred_check
      _
    $region35: #{tpu_custom_call.1} parent=1 // pred_check_branch
      %72 = sbr.rel (0) target = $region37
    $region36: #{tpu_custom_call.1} parent=1 // pred_region
      %73 = dma.done [#allocation9], 4096
    $region37: #{tpu_custom_call.1} parent=1 // pred_fallthru
      _
    %v75 = vld [vmem:[#allocation2] sm:$0xf]
    %v76 = vld [vmem:[#allocation2 + $0x4] sm:$0xf]
    %v77 = vld [vmem:[#allocation2 + $0x8] sm:$0xf]
    %v78 = vld [vmem:[#allocation2 + $0xc] sm:$0xf]
    %v79 = vld [vmem:[#allocation2 + $0x10] sm:$0xf]
    %v80 = vld [vmem:[#allocation2 + $0x14] sm:$0xf]
    %v81 = vld [vmem:[#allocation2 + $0x18] sm:$0xf]
    %v82 = vld [vmem:[#allocation2 + $0x1c] sm:$0xf]
    %v83 = vld [vmem:[#allocation2 + $0x20] sm:$0xf]
    %v84 = vld [vmem:[#allocation2 + $0x24] sm:$0xf]
    %v85 = vld [vmem:[#allocation2 + $0x28] sm:$0xf]
    %v86 = vld [vmem:[#allocation2 + $0x2c] sm:$0xf]
    %v87 = vld [vmem:[#allocation2 + $0x30] sm:$0xf]
    %v88 = vld [vmem:[#allocation2 + $0x34] sm:$0xf]
    %v89 = vld [vmem:[#allocation2 + $0x38] sm:$0xf]
    %v90 = vld [vmem:[#allocation2 + $0x3c] sm:$0xf]
    %v91 = vld [vmem:[#allocation5] sm:$0xf]
    %v92 = vld [vmem:[#allocation5 + $0x4] sm:$0xf]
    %v93 = vld [vmem:[#allocation5 + $0x8] sm:$0xf]
    %v94 = vld [vmem:[#allocation5 + $0xc] sm:$0xf]
    %v95 = vld [vmem:[#allocation5 + $0x10] sm:$0xf]
    %v96 = vld [vmem:[#allocation5 + $0x14] sm:$0xf]
    %v97 = vld [vmem:[#allocation5 + $0x18] sm:$0xf]
    %v98 = vld [vmem:[#allocation5 + $0x1c] sm:$0xf]
    %v99 = vld [vmem:[#allocation5 + $0x20] sm:$0xf]
    %v100 = vld [vmem:[#allocation5 + $0x24] sm:$0xf]
    %v101 = vld [vmem:[#allocation5 + $0x28] sm:$0xf]
    %v102 = vld [vmem:[#allocation5 + $0x2c] sm:$0xf]
    %v103 = vld [vmem:[#allocation5 + $0x30] sm:$0xf]
    %v104 = vld [vmem:[#allocation5 + $0x34] sm:$0xf]
    %v105 = vld [vmem:[#allocation5 + $0x38] sm:$0xf]
    %v106 = vld [vmem:[#allocation5 + $0x3c] sm:$0xf]
    %v107 = vld [vmem:[#allocation5 + $0x40] sm:$0xf]
    %v108 = vld [vmem:[#allocation5 + $0x44] sm:$0xf]
    %v109 = vld [vmem:[#allocation5 + $0x48] sm:$0xf]
    %v110 = vld [vmem:[#allocation5 + $0x4c] sm:$0xf]
    %v111 = vld [vmem:[#allocation5 + $0x50] sm:$0xf]
    %v112 = vld [vmem:[#allocation5 + $0x54] sm:$0xf]
    %v113 = vld [vmem:[#allocation5 + $0x58] sm:$0xf]
    %v114 = vld [vmem:[#allocation5 + $0x5c] sm:$0xf]
    %v115 = vld [vmem:[#allocation5 + $0x60] sm:$0xf]
    %v116 = vld [vmem:[#allocation5 + $0x64] sm:$0xf]
    %v117 = vld [vmem:[#allocation5 + $0x68] sm:$0xf]
    %v118 = vld [vmem:[#allocation5 + $0x6c] sm:$0xf]
    %v119 = vld [vmem:[#allocation5 + $0x70] sm:$0xf]
    %v120 = vld [vmem:[#allocation5 + $0x74] sm:$0xf]
    %v121 = vld [vmem:[#allocation5 + $0x78] sm:$0xf]
    %v122 = vld [vmem:[#allocation5 + $0x7c] sm:$0xf]
    %v123 = vld [vmem:[#allocation5 + $0x80] sm:$0xf]
    %v124 = vld [vmem:[#allocation5 + $0x84] sm:$0xf]
    %v125 = vld [vmem:[#allocation5 + $0x88] sm:$0xf]
    %v126 = vld [vmem:[#allocation5 + $0x8c] sm:$0xf]
    %v127 = vld [vmem:[#allocation5 + $0x90] sm:$0xf]
    %v128 = vld [vmem:[#allocation5 + $0x94] sm:$0xf]
    %v129 = vld [vmem:[#allocation5 + $0x98] sm:$0xf]
    %v130 = vld [vmem:[#allocation5 + $0x9c] sm:$0xf]
    %v131 = vld [vmem:[#allocation5 + $0xa0] sm:$0xf]
    %v132 = vld [vmem:[#allocation5 + $0xa4] sm:$0xf]
    %v133 = vld [vmem:[#allocation5 + $0xa8] sm:$0xf]
    %v134 = vld [vmem:[#allocation5 + $0xac] sm:$0xf]
    %v135 = vld [vmem:[#allocation5 + $0xb0] sm:$0xf]
    %v136 = vld [vmem:[#allocation5 + $0xb4] sm:$0xf]
    %v137 = vld [vmem:[#allocation5 + $0xb8] sm:$0xf]
    %v138 = vld [vmem:[#allocation5 + $0xbc] sm:$0xf]
    %v139 = vld [vmem:[#allocation5 + $0xc0] sm:$0xf]
    %v140 = vld [vmem:[#allocation5 + $0xc4] sm:$0xf]
    %v141 = vld [vmem:[#allocation5 + $0xc8] sm:$0xf]
    %v142 = vld [vmem:[#allocation5 + $0xcc] sm:$0xf]
    %v143 = vld [vmem:[#allocation5 + $0xd0] sm:$0xf]
    %v144 = vld [vmem:[#allocation5 + $0xd4] sm:$0xf]
    %v145 = vld [vmem:[#allocation5 + $0xd8] sm:$0xf]
    %v146 = vld [vmem:[#allocation5 + $0xdc] sm:$0xf]
    %v147 = vld [vmem:[#allocation5 + $0xe0] sm:$0xf]
    %v148 = vld [vmem:[#allocation5 + $0xe4] sm:$0xf]
    %v149 = vld [vmem:[#allocation5 + $0xe8] sm:$0xf]
    %v150 = vld [vmem:[#allocation5 + $0xec] sm:$0xf]
    %v151 = vld [vmem:[#allocation5 + $0xf0] sm:$0xf]
    %v152 = vld [vmem:[#allocation5 + $0xf4] sm:$0xf]
    %v153 = vld [vmem:[#allocation5 + $0xf8] sm:$0xf]
    %v154 = vld [vmem:[#allocation5 + $0xfc] sm:$0xf]
    %v155 = vld [vmem:[#allocation7] sm:$0xf]
    %v157 = vlaneseq
    %v158 = vshrl.u32 %v157, 7
    %v159 = vsub.s32 0, %v158
    %v160 = vrot.slane %v155, %v159
    %v161 = vlaneseq
    %v162 = vshrl.u32 %v161, 7
    %v163 = vsub.s32 1, %v162
    %v164 = vrot.slane %v155, %v163
    %v165 = vlaneseq
    %v166 = vshrl.u32 %v165, 7
    %v167 = vsub.s32 2, %v166
    %v168 = vrot.slane %v155, %v167
    %v169 = vlaneseq
    %v170 = vshrl.u32 %v169, 7
    %v171 = vsub.s32 3, %v170
    %v172 = vrot.slane %v155, %v171
    %v193 = vunpack.c.l.b16 %v75
    %v194 = vunpack.c.l.b16 %v76
    %v195 = vunpack.c.l.b16 %v77
    %v196 = vunpack.c.l.b16 %v78
    %v197 = vunpack.c.l.b16 %v79
    %v198 = vunpack.c.l.b16 %v80
    %v199 = vunpack.c.l.b16 %v81
    %v200 = vunpack.c.l.b16 %v82
    %v201 = vunpack.c.l.b16 %v83
    %v202 = vunpack.c.l.b16 %v84
    %v203 = vunpack.c.l.b16 %v85
    %v204 = vunpack.c.l.b16 %v86
    %v205 = vunpack.c.l.b16 %v87
    %v206 = vunpack.c.l.b16 %v88
    %v207 = vunpack.c.l.b16 %v89
    %v208 = vunpack.c.l.b16 %v90
    %v209 = vpack.c.b16 %v194, %v193
    %v210 = vpack.c.b16 %v196, %v195
    %v211 = vpack.c.b16 %v198, %v197
    %v212 = vpack.c.b16 %v200, %v199
    %v213 = vpack.c.b16 %v202, %v201
    %v214 = vpack.c.b16 %v204, %v203
    %v215 = vpack.c.b16 %v206, %v205
    %v216 = vpack.c.b16 %v208, %v207
    %v289 = vunpack.c.l.b16 %v91
    %v290 = vunpack.c.l.b16 %v92
    %v291 = vunpack.c.l.b16 %v93
    %v292 = vunpack.c.l.b16 %v94
    %v293 = vunpack.c.l.b16 %v95
    %v294 = vunpack.c.l.b16 %v96
    %v295 = vunpack.c.l.b16 %v97
    %v296 = vunpack.c.l.b16 %v98
    %v297 = vunpack.c.l.b16 %v99
    %v298 = vunpack.c.l.b16 %v100
    %v299 = vunpack.c.l.b16 %v101
    %v300 = vunpack.c.l.b16 %v102
    %v301 = vunpack.c.l.b16 %v103
    %v302 = vunpack.c.l.b16 %v104
    %v303 = vunpack.c.l.b16 %v105
    %v304 = vunpack.c.l.b16 %v106
    %v305 = vunpack.c.l.b16 %v107
    %v306 = vunpack.c.l.b16 %v108
    %v307 = vunpack.c.l.b16 %v109
    %v308 = vunpack.c.l.b16 %v110
    %v309 = vunpack.c.l.b16 %v111
    %v310 = vunpack.c.l.b16 %v112
    %v311 = vunpack.c.l.b16 %v113
    %v312 = vunpack.c.l.b16 %v114
    %v313 = vunpack.c.l.b16 %v115
    %v314 = vunpack.c.l.b16 %v116
    %v315 = vunpack.c.l.b16 %v117
    %v316 = vunpack.c.l.b16 %v118
    %v317 = vunpack.c.l.b16 %v119
    %v318 = vunpack.c.l.b16 %v120
    %v319 = vunpack.c.l.b16 %v121
    %v320 = vunpack.c.l.b16 %v122
    %v321 = vunpack.c.l.b16 %v123
    %v322 = vunpack.c.l.b16 %v124
    %v323 = vunpack.c.l.b16 %v125
    %v324 = vunpack.c.l.b16 %v126
    %v325 = vunpack.c.l.b16 %v127
    %v326 = vunpack.c.l.b16 %v128
    %v327 = vunpack.c.l.b16 %v129
    %v328 = vunpack.c.l.b16 %v130
    %v329 = vunpack.c.l.b16 %v131
    %v330 = vunpack.c.l.b16 %v132
    %v331 = vunpack.c.l.b16 %v133
    %v332 = vunpack.c.l.b16 %v134
    %v333 = vunpack.c.l.b16 %v135
    %v334 = vunpack.c.l.b16 %v136
    %v335 = vunpack.c.l.b16 %v137
    %v336 = vunpack.c.l.b16 %v138
    %v337 = vunpack.c.l.b16 %v139
    %v338 = vunpack.c.l.b16 %v140
    %v339 = vunpack.c.l.b16 %v141
    %v340 = vunpack.c.l.b16 %v142
    %v341 = vunpack.c.l.b16 %v143
    %v342 = vunpack.c.l.b16 %v144
    %v343 = vunpack.c.l.b16 %v145
    %v344 = vunpack.c.l.b16 %v146
    %v345 = vunpack.c.l.b16 %v147
    %v346 = vunpack.c.l.b16 %v148
    %v347 = vunpack.c.l.b16 %v149
    %v348 = vunpack.c.l.b16 %v150
    %v349 = vunpack.c.l.b16 %v151
    %v350 = vunpack.c.l.b16 %v152
    %v351 = vunpack.c.l.b16 %v153
    %v352 = vunpack.c.l.b16 %v154
    %v353 = vpack.c.b16 %v290, %v289
    %v354 = vpack.c.b16 %v292, %v291
    %v355 = vpack.c.b16 %v294, %v293
    %v356 = vpack.c.b16 %v296, %v295
    %v357 = vpack.c.b16 %v298, %v297
    %v358 = vpack.c.b16 %v300, %v299
    %v359 = vpack.c.b16 %v302, %v301
    %v360 = vpack.c.b16 %v304, %v303
    %v361 = vpack.c.b16 %v306, %v305
    %v362 = vpack.c.b16 %v308, %v307
    %v363 = vpack.c.b16 %v310, %v309
    %v364 = vpack.c.b16 %v312, %v311
    %v365 = vpack.c.b16 %v314, %v313
    %v366 = vpack.c.b16 %v316, %v315
    %v367 = vpack.c.b16 %v318, %v317
    %v368 = vpack.c.b16 %v320, %v319
    %v369 = vpack.c.b16 %v322, %v321
    %v370 = vpack.c.b16 %v324, %v323
    %v371 = vpack.c.b16 %v326, %v325
    %v372 = vpack.c.b16 %v328, %v327
    %v373 = vpack.c.b16 %v330, %v329
    %v374 = vpack.c.b16 %v332, %v331
    %v375 = vpack.c.b16 %v334, %v333
    %v376 = vpack.c.b16 %v336, %v335
    %v377 = vpack.c.b16 %v338, %v337
    %v378 = vpack.c.b16 %v340, %v339
    %v379 = vpack.c.b16 %v342, %v341
    %v380 = vpack.c.b16 %v344, %v343
    %v381 = vpack.c.b16 %v346, %v345
    %v382 = vpack.c.b16 %v348, %v347
    %v383 = vpack.c.b16 %v350, %v349
    %v384 = vpack.c.b16 %v352, %v351
    %417 = vmatprep.subr.bf16.mxu0 0
    %418 = vmatpush1.bf16.xpose.msra.mxu0 %v360
    %419 = vmatprep.subr.bf16.mxu0 0
    %420 = vmatpush1.bf16.xpose.msra.mxu0 %v359
    %421 = vmatprep.subr.bf16.mxu0 0
    %422 = vmatpush1.bf16.xpose.msra.mxu0 %v358
    %423 = vmatprep.subr.bf16.mxu0 0
    %424 = vmatpush1.bf16.xpose.msra.mxu0 %v357
    %425 = vmatprep.subr.bf16.mxu0 0
    %426 = vmatpush1.bf16.xpose.msra.mxu0 %v356
    %427 = vmatprep.subr.bf16.mxu0 0
    %428 = vmatpush1.bf16.xpose.msra.mxu0 %v355
    %429 = vmatprep.subr.bf16.mxu0 0
    %430 = vmatpush1.bf16.xpose.msra.mxu0 %v354
    %431 = vmatprep.subr.bf16.mxu0 0
    %432 = vmatpush1.bf16.xpose.msra.mxu0 %v353
    %433 = vmatprep.subr.bf16.mxu0 0
    %434 = vmatpush2.bf16.xpose.msra.mxu0 %v368
    %435 = vmatprep.subr.bf16.mxu0 0
    %436 = vmatpush2.bf16.xpose.msra.mxu0 %v367
    %437 = vmatprep.subr.bf16.mxu0 0
    %438 = vmatpush2.bf16.xpose.msra.mxu0 %v366
    %439 = vmatprep.subr.bf16.mxu0 0
    %440 = vmatpush2.bf16.xpose.msra.mxu0 %v365
    %441 = vmatprep.subr.bf16.mxu0 0
    %442 = vmatpush2.bf16.xpose.msra.mxu0 %v364
    %443 = vmatprep.subr.bf16.mxu0 0
    %444 = vmatpush2.bf16.xpose.msra.mxu0 %v363
    %445 = vmatprep.subr.bf16.mxu0 0
    %446 = vmatpush2.bf16.xpose.msra.mxu0 %v362
    %447 = vmatprep.subr.bf16.mxu0 0
    %448 = vmatpush2.bf16.xpose.msra.mxu0 %v361
    %449 = vmatprep.mubr.bf16.mxu0 0
    %450 = vmatmul.mubr.bf16.gmra.mxu0 %v209
    %v451 = vpop.f32.mrf.mxu0
    %v452 = vadd.f32 %v160, %v451
    %v453 = vpop.f32.mrf.mxu0
    %v454 = vadd.f32 %v164, %v453
    %v455 = vpop.f32.mrf.mxu0
    %v456 = vadd.f32 %v160, %v455
    %v457 = vpop.f32.mrf.mxu0
    %v458 = vadd.f32 %v164, %v457
    %459 = vmatprep.mubr.bf16.mxu0 0
    %460 = vmatmul.mubr.bf16.gmra.mxu0 %v210
    %v461 = vpop.f32.mrf.mxu0
    %v462 = vadd.f32 %v160, %v461
    %v463 = vpop.f32.mrf.mxu0
    %v464 = vadd.f32 %v164, %v463
    %v465 = vpop.f32.mrf.mxu0
    %v466 = vadd.f32 %v160, %v465
    %v467 = vpop.f32.mrf.mxu0
    %v468 = vadd.f32 %v164, %v467
    %469 = vmatprep.mubr.bf16.mxu0 0
    %470 = vmatmul.mubr.bf16.gmra.mxu0 %v211
    %v471 = vpop.f32.mrf.mxu0
    %v472 = vadd.f32 %v160, %v471
    %v473 = vpop.f32.mrf.mxu0
    %v474 = vadd.f32 %v164, %v473
    %v475 = vpop.f32.mrf.mxu0
    %v476 = vadd.f32 %v160, %v475
    %v477 = vpop.f32.mrf.mxu0
    %v478 = vadd.f32 %v164, %v477
    %479 = vmatprep.mubr.bf16.mxu0 0
    %480 = vmatmul.mubr.bf16.gmra.mxu0 %v212
    %v481 = vpop.f32.mrf.mxu0
    %v482 = vadd.f32 %v160, %v481
    %v483 = vpop.f32.mrf.mxu0
    %v484 = vadd.f32 %v164, %v483
    %v485 = vpop.f32.mrf.mxu0
    %v486 = vadd.f32 %v160, %v485
    %v487 = vpop.f32.mrf.mxu0
    %v488 = vadd.f32 %v164, %v487
    %489 = vmatprep.mubr.bf16.mxu0 0
    %490 = vmatmul.mubr.bf16.gmra.mxu0 %v213
    %v491 = vpop.f32.mrf.mxu0
    %v492 = vadd.f32 %v160, %v491
    %v493 = vpop.f32.mrf.mxu0
    %v494 = vadd.f32 %v164, %v493
    %v495 = vpop.f32.mrf.mxu0
    %v496 = vadd.f32 %v160, %v495
    %v497 = vpop.f32.mrf.mxu0
    %v498 = vadd.f32 %v164, %v497
    %499 = vmatprep.mubr.bf16.mxu0 0
    %500 = vmatmul.mubr.bf16.gmra.mxu0 %v214
    %v501 = vpop.f32.mrf.mxu0
    %v502 = vadd.f32 %v160, %v501
    %v503 = vpop.f32.mrf.mxu0
    %v504 = vadd.f32 %v164, %v503
    %v505 = vpop.f32.mrf.mxu0
    %v506 = vadd.f32 %v160, %v505
    %v507 = vpop.f32.mrf.mxu0
    %v508 = vadd.f32 %v164, %v507
    %509 = vmatprep.mubr.bf16.mxu0 0
    %510 = vmatmul.mubr.bf16.gmra.mxu0 %v215
    %v511 = vpop.f32.mrf.mxu0
    %v512 = vadd.f32 %v160, %v511
    %v513 = vpop.f32.mrf.mxu0
    %v514 = vadd.f32 %v164, %v513
    %v515 = vpop.f32.mrf.mxu0
    %v516 = vadd.f32 %v160, %v515
    %v517 = vpop.f32.mrf.mxu0
    %v518 = vadd.f32 %v164, %v517
    %519 = vmatprep.mubr.bf16.mxu0 0
    %520 = vmatmul.mubr.bf16.gmra.mxu0 %v216
    %v521 = vpop.f32.mrf.mxu0
    %v522 = vadd.f32 %v160, %v521
    %v523 = vpop.f32.mrf.mxu0
    %v524 = vadd.f32 %v164, %v523
    %v525 = vpop.f32.mrf.mxu0
    %v526 = vadd.f32 %v160, %v525
    %v527 = vpop.f32.mrf.mxu0
    %v528 = vadd.f32 %v164, %v527
    %529 = vdwg.mxu0
    %530 = vmatprep.subr.bf16.mxu0 0
    %531 = vmatpush1.bf16.xpose.msra.mxu0 %v376
    %532 = vmatprep.subr.bf16.mxu0 0
    %533 = vmatpush1.bf16.xpose.msra.mxu0 %v375
    %534 = vmatprep.subr.bf16.mxu0 0
    %535 = vmatpush1.bf16.xpose.msra.mxu0 %v374
    %536 = vmatprep.subr.bf16.mxu0 0
    %537 = vmatpush1.bf16.xpose.msra.mxu0 %v373
    %538 = vmatprep.subr.bf16.mxu0 0
    %539 = vmatpush1.bf16.xpose.msra.mxu0 %v372
    %540 = vmatprep.subr.bf16.mxu0 0
    %541 = vmatpush1.bf16.xpose.msra.mxu0 %v371
    %542 = vmatprep.subr.bf16.mxu0 0
    %543 = vmatpush1.bf16.xpose.msra.mxu0 %v370
    %544 = vmatprep.subr.bf16.mxu0 0
    %545 = vmatpush1.bf16.xpose.msra.mxu0 %v369
    %546 = vmatprep.subr.bf16.mxu0 0
    %547 = vmatpush2.bf16.xpose.msra.mxu0 %v384
    %548 = vmatprep.subr.bf16.mxu0 0
    %549 = vmatpush2.bf16.xpose.msra.mxu0 %v383
    %550 = vmatprep.subr.bf16.mxu0 0
    %551 = vmatpush2.bf16.xpose.msra.mxu0 %v382
    %552 = vmatprep.subr.bf16.mxu0 0
    %553 = vmatpush2.bf16.xpose.msra.mxu0 %v381
    %554 = vmatprep.subr.bf16.mxu0 0
    %555 = vmatpush2.bf16.xpose.msra.mxu0 %v380
    %556 = vmatprep.subr.bf16.mxu0 0
    %557 = vmatpush2.bf16.xpose.msra.mxu0 %v379
    %558 = vmatprep.subr.bf16.mxu0 0
    %559 = vmatpush2.bf16.xpose.msra.mxu0 %v378
    %560 = vmatprep.subr.bf16.mxu0 0
    %561 = vmatpush2.bf16.xpose.msra.mxu0 %v377
    %562 = vmatprep.mubr.bf16.mxu0 0
    %563 = vmatmul.mubr.bf16.gmra.mxu0 %v209
    %v564 = vpop.f32.mrf.mxu0
    %v565 = vadd.f32 %v168, %v564
    %v566 = vpop.f32.mrf.mxu0
    %v567 = vadd.f32 %v172, %v566
    %v568 = vpop.f32.mrf.mxu0
    %v569 = vadd.f32 %v168, %v568
    %v570 = vpop.f32.mrf.mxu0
    %v571 = vadd.f32 %v172, %v570
    %572 = vmatprep.mubr.bf16.mxu0 0
    %573 = vmatmul.mubr.bf16.gmra.mxu0 %v210
    %v574 = vpop.f32.mrf.mxu0
    %v575 = vadd.f32 %v168, %v574
    %v576 = vpop.f32.mrf.mxu0
    %v577 = vadd.f32 %v172, %v576
    %v578 = vpop.f32.mrf.mxu0
    %v579 = vadd.f32 %v168, %v578
    %v580 = vpop.f32.mrf.mxu0
    %v581 = vadd.f32 %v172, %v580
    %582 = vmatprep.mubr.bf16.mxu0 0
    %583 = vmatmul.mubr.bf16.gmra.mxu0 %v211
    %v584 = vpop.f32.mrf.mxu0
    %v585 = vadd.f32 %v168, %v584
    %v586 = vpop.f32.mrf.mxu0
    %v587 = vadd.f32 %v172, %v586
    %v588 = vpop.f32.mrf.mxu0
    %v589 = vadd.f32 %v168, %v588
    %v590 = vpop.f32.mrf.mxu0
    %v591 = vadd.f32 %v172, %v590
    %592 = vmatprep.mubr.bf16.mxu0 0
    %593 = vmatmul.mubr.bf16.gmra.mxu0 %v212
    %v594 = vpop.f32.mrf.mxu0
    %v595 = vadd.f32 %v168, %v594
    %v596 = vpop.f32.mrf.mxu0
    %v597 = vadd.f32 %v172, %v596
    %v598 = vpop.f32.mrf.mxu0
    %v599 = vadd.f32 %v168, %v598
    %v600 = vpop.f32.mrf.mxu0
    %v601 = vadd.f32 %v172, %v600
    %602 = vmatprep.mubr.bf16.mxu0 0
    %603 = vmatmul.mubr.bf16.gmra.mxu0 %v213
    %v604 = vpop.f32.mrf.mxu0
    %v605 = vadd.f32 %v168, %v604
    %v606 = vpop.f32.mrf.mxu0
    %v607 = vadd.f32 %v172, %v606
    %v608 = vpop.f32.mrf.mxu0
    %v609 = vadd.f32 %v168, %v608
    %v610 = vpop.f32.mrf.mxu0
    %v611 = vadd.f32 %v172, %v610
    %612 = vmatprep.mubr.bf16.mxu0 0
    %613 = vmatmul.mubr.bf16.gmra.mxu0 %v214
    %v614 = vpop.f32.mrf.mxu0
    %v615 = vadd.f32 %v168, %v614
    %v616 = vpop.f32.mrf.mxu0
    %v617 = vadd.f32 %v172, %v616
    %v618 = vpop.f32.mrf.mxu0
    %v619 = vadd.f32 %v168, %v618
    %v620 = vpop.f32.mrf.mxu0
    %v621 = vadd.f32 %v172, %v620
    %622 = vmatprep.mubr.bf16.mxu0 0
    %623 = vmatmul.mubr.bf16.gmra.mxu0 %v215
    %v624 = vpop.f32.mrf.mxu0
    %v625 = vadd.f32 %v168, %v624
    %v626 = vpop.f32.mrf.mxu0
    %v627 = vadd.f32 %v172, %v626
    %v628 = vpop.f32.mrf.mxu0
    %v629 = vadd.f32 %v168, %v628
    %v630 = vpop.f32.mrf.mxu0
    %v631 = vadd.f32 %v172, %v630
    %632 = vmatprep.mubr.bf16.mxu0 0
    %633 = vmatmul.mubr.bf16.gmra.mxu0 %v216
    %v634 = vpop.f32.mrf.mxu0
    %v635 = vadd.f32 %v168, %v634
    %v636 = vpop.f32.mrf.mxu0
    %v637 = vadd.f32 %v172, %v636
    %v638 = vpop.f32.mrf.mxu0
    %v639 = vadd.f32 %v168, %v638
    %v640 = vpop.f32.mrf.mxu0
    %v641 = vadd.f32 %v172, %v640
    %642 = vdwg.mxu0
    %v643 = vmax.f32 %v452, 0.0
    %v644 = vmax.f32 %v454, 0.0
    %v645 = vmax.f32 %v565, 0.0
    %v646 = vmax.f32 %v567, 0.0
    %v647 = vmax.f32 %v456, 0.0
    %v648 = vmax.f32 %v458, 0.0
    %v649 = vmax.f32 %v569, 0.0
    %v650 = vmax.f32 %v571, 0.0
    %v651 = vmax.f32 %v462, 0.0
    %v652 = vmax.f32 %v464, 0.0
    %v653 = vmax.f32 %v575, 0.0
    %v654 = vmax.f32 %v577, 0.0
    %v655 = vmax.f32 %v466, 0.0
    %v656 = vmax.f32 %v468, 0.0
    %v657 = vmax.f32 %v579, 0.0
    %v658 = vmax.f32 %v581, 0.0
    %v659 = vmax.f32 %v472, 0.0
    %v660 = vmax.f32 %v474, 0.0
    %v661 = vmax.f32 %v585, 0.0
    %v662 = vmax.f32 %v587, 0.0
    %v663 = vmax.f32 %v476, 0.0
    %v664 = vmax.f32 %v478, 0.0
    %v665 = vmax.f32 %v589, 0.0
    %v666 = vmax.f32 %v591, 0.0
    %v667 = vmax.f32 %v482, 0.0
    %v668 = vmax.f32 %v484, 0.0
    %v669 = vmax.f32 %v595, 0.0
    %v670 = vmax.f32 %v597, 0.0
    %v671 = vmax.f32 %v486, 0.0
    %v672 = vmax.f32 %v488, 0.0
    %v673 = vmax.f32 %v599, 0.0
    %v674 = vmax.f32 %v601, 0.0
    %v675 = vmax.f32 %v492, 0.0
    %v676 = vmax.f32 %v494, 0.0
    %v677 = vmax.f32 %v605, 0.0
    %v678 = vmax.f32 %v607, 0.0
    %v679 = vmax.f32 %v496, 0.0
    %v680 = vmax.f32 %v498, 0.0
    %v681 = vmax.f32 %v609, 0.0
    %v682 = vmax.f32 %v611, 0.0
    %v683 = vmax.f32 %v502, 0.0
    %v684 = vmax.f32 %v504, 0.0
    %v685 = vmax.f32 %v615, 0.0
    %v686 = vmax.f32 %v617, 0.0
    %v687 = vmax.f32 %v506, 0.0
    %v688 = vmax.f32 %v508, 0.0
    %v689 = vmax.f32 %v619, 0.0
    %v690 = vmax.f32 %v621, 0.0
    %v691 = vmax.f32 %v512, 0.0
    %v692 = vmax.f32 %v514, 0.0
    %v693 = vmax.f32 %v625, 0.0
    %v694 = vmax.f32 %v627, 0.0
    %v695 = vmax.f32 %v516, 0.0
    %v696 = vmax.f32 %v518, 0.0
    %v697 = vmax.f32 %v629, 0.0
    %v698 = vmax.f32 %v631, 0.0
    %v699 = vmax.f32 %v522, 0.0
    %v700 = vmax.f32 %v524, 0.0
    %v701 = vmax.f32 %v635, 0.0
    %v702 = vmax.f32 %v637, 0.0
    %v703 = vmax.f32 %v526, 0.0
    %v704 = vmax.f32 %v528, 0.0
    %v705 = vmax.f32 %v639, 0.0
    %v706 = vmax.f32 %v641, 0.0
    %v707 = vpack.c.bf16 %v647, %v643
    %v708 = vpack.c.bf16 %v648, %v644
    %v709 = vpack.c.bf16 %v649, %v645
    %v710 = vpack.c.bf16 %v650, %v646
    %v711 = vpack.c.bf16 %v655, %v651
    %v712 = vpack.c.bf16 %v656, %v652
    %v713 = vpack.c.bf16 %v657, %v653
    %v714 = vpack.c.bf16 %v658, %v654
    %v715 = vpack.c.bf16 %v663, %v659
    %v716 = vpack.c.bf16 %v664, %v660
    %v717 = vpack.c.bf16 %v665, %v661
    %v718 = vpack.c.bf16 %v666, %v662
    %v719 = vpack.c.bf16 %v671, %v667
    %v720 = vpack.c.bf16 %v672, %v668
    %v721 = vpack.c.bf16 %v673, %v669
    %v722 = vpack.c.bf16 %v674, %v670
    %v723 = vpack.c.bf16 %v679, %v675
    %v724 = vpack.c.bf16 %v680, %v676
    %v725 = vpack.c.bf16 %v681, %v677
    %v726 = vpack.c.bf16 %v682, %v678
    %v727 = vpack.c.bf16 %v687, %v683
    %v728 = vpack.c.bf16 %v688, %v684
    %v729 = vpack.c.bf16 %v689, %v685
    %v730 = vpack.c.bf16 %v690, %v686
    %v731 = vpack.c.bf16 %v695, %v691
    %v732 = vpack.c.bf16 %v696, %v692
    %v733 = vpack.c.bf16 %v697, %v693
    %v734 = vpack.c.bf16 %v698, %v694
    %v735 = vpack.c.bf16 %v703, %v699
    %v736 = vpack.c.bf16 %v704, %v700
    %v737 = vpack.c.bf16 %v705, %v701
    %v738 = vpack.c.bf16 %v706, %v702
    %v739 = vld [vmem:[#allocation8] sm:$0xff]
    %v740 = vld [vmem:[#allocation8 + $0x8] sm:$0xff]
    %v741 = vld [vmem:[#allocation8 + $0x10] sm:$0xff]
    %v742 = vld [vmem:[#allocation8 + $0x18] sm:$0xff]
    %v743 = vld [vmem:[#allocation8 + $0x20] sm:$0xff]
    %v744 = vld [vmem:[#allocation8 + $0x28] sm:$0xff]
    %v745 = vld [vmem:[#allocation8 + $0x30] sm:$0xff]
    %v746 = vld [vmem:[#allocation8 + $0x38] sm:$0xff]
    %v747 = vld [vmem:[#allocation8 + $0x40] sm:$0xff]
    %v748 = vld [vmem:[#allocation8 + $0x48] sm:$0xff]
    %v749 = vld [vmem:[#allocation8 + $0x50] sm:$0xff]
    %v750 = vld [vmem:[#allocation8 + $0x58] sm:$0xff]
    %v751 = vld [vmem:[#allocation8 + $0x60] sm:$0xff]
    %v752 = vld [vmem:[#allocation8 + $0x68] sm:$0xff]
    %v753 = vld [vmem:[#allocation8 + $0x70] sm:$0xff]
    %v754 = vld [vmem:[#allocation8 + $0x78] sm:$0xff]
    %v755 = vld [vmem:[#allocation8 + $0x80] sm:$0xff]
    %v756 = vld [vmem:[#allocation8 + $0x88] sm:$0xff]
    %v757 = vld [vmem:[#allocation8 + $0x90] sm:$0xff]
    %v758 = vld [vmem:[#allocation8 + $0x98] sm:$0xff]
    %v759 = vld [vmem:[#allocation8 + $0xa0] sm:$0xff]
    %v760 = vld [vmem:[#allocation8 + $0xa8] sm:$0xff]
    %v761 = vld [vmem:[#allocation8 + $0xb0] sm:$0xff]
    %v762 = vld [vmem:[#allocation8 + $0xb8] sm:$0xff]
    %v763 = vld [vmem:[#allocation8 + $0xc0] sm:$0xff]
    %v764 = vld [vmem:[#allocation8 + $0xc8] sm:$0xff]
    %v765 = vld [vmem:[#allocation8 + $0xd0] sm:$0xff]
    %v766 = vld [vmem:[#allocation8 + $0xd8] sm:$0xff]
    %v767 = vld [vmem:[#allocation8 + $0xe0] sm:$0xff]
    %v768 = vld [vmem:[#allocation8 + $0xe8] sm:$0xff]
    %v769 = vld [vmem:[#allocation8 + $0xf0] sm:$0xff]
    %v770 = vld [vmem:[#allocation8 + $0xf8] sm:$0xff]
    %v771 = vld [vmem:[%s4] sm:$0x1]
    %v773 = vlaneseq
    %v774 = vshrl.u32 %v773, 7
    %v775 = vsub.s32 0, %v774
    %v776 = vrot.slane %v771, %v775
    %v810 = vunpack.c.l.b16 %v739
    %v811 = vunpack.c.h.b16 %v739
    %v812 = vunpack.c.l.b16 %v740
    %v813 = vunpack.c.h.b16 %v740
    %v814 = vunpack.c.l.b16 %v741
    %v815 = vunpack.c.h.b16 %v741
    %v816 = vunpack.c.l.b16 %v742
    %v817 = vunpack.c.h.b16 %v742
    %v818 = vunpack.c.l.b16 %v743
    %v819 = vunpack.c.h.b16 %v743
    %v820 = vunpack.c.l.b16 %v744
    %v821 = vunpack.c.h.b16 %v744
    %v822 = vunpack.c.l.b16 %v745
    %v823 = vunpack.c.h.b16 %v745
    %v824 = vunpack.c.l.b16 %v746
    %v825 = vunpack.c.h.b16 %v746
    %v826 = vunpack.c.l.b16 %v747
    %v827 = vunpack.c.h.b16 %v747
    %v828 = vunpack.c.l.b16 %v748
    %v829 = vunpack.c.h.b16 %v748
    %v830 = vunpack.c.l.b16 %v749
    %v831 = vunpack.c.h.b16 %v749
    %v832 = vunpack.c.l.b16 %v750
    %v833 = vunpack.c.h.b16 %v750
    %v834 = vunpack.c.l.b16 %v751
    %v835 = vunpack.c.h.b16 %v751
    %v836 = vunpack.c.l.b16 %v752
    %v837 = vunpack.c.h.b16 %v752
    %v838 = vunpack.c.l.b16 %v753
    %v839 = vunpack.c.h.b16 %v753
    %v840 = vunpack.c.l.b16 %v754
    %v841 = vunpack.c.h.b16 %v754
    %v842 = vunpack.c.l.b16 %v755
    %v843 = vunpack.c.h.b16 %v755
    %v844 = vunpack.c.l.b16 %v756
    %v845 = vunpack.c.h.b16 %v756
    %v846 = vunpack.c.l.b16 %v757
    %v847 = vunpack.c.h.b16 %v757
    %v848 = vunpack.c.l.b16 %v758
    %v849 = vunpack.c.h.b16 %v758
    %v850 = vunpack.c.l.b16 %v759
    %v851 = vunpack.c.h.b16 %v759
    %v852 = vunpack.c.l.b16 %v760
    %v853 = vunpack.c.h.b16 %v760
    %v854 = vunpack.c.l.b16 %v761
    %v855 = vunpack.c.h.b16 %v761
    %v856 = vunpack.c.l.b16 %v762
    %v857 = vunpack.c.h.b16 %v762
    %v858 = vunpack.c.l.b16 %v763
    %v859 = vunpack.c.h.b16 %v763
    %v860 = vunpack.c.l.b16 %v764
    %v861 = vunpack.c.h.b16 %v764
    %v862 = vunpack.c.l.b16 %v765
    %v863 = vunpack.c.h.b16 %v765
    %v864 = vunpack.c.l.b16 %v766
    %v865 = vunpack.c.h.b16 %v766
    %v866 = vunpack.c.l.b16 %v767
    %v867 = vunpack.c.h.b16 %v767
    %v868 = vunpack.c.l.b16 %v768
    %v869 = vunpack.c.h.b16 %v768
    %v870 = vunpack.c.l.b16 %v769
    %v871 = vunpack.c.h.b16 %v769
    %v872 = vunpack.c.l.b16 %v770
    %v873 = vunpack.c.h.b16 %v770
    %v874 = vpack.c.b16 %v814, %v810
    %v875 = vpack.c.b16 %v815, %v811
    %v876 = vpack.c.b16 %v816, %v812
    %v877 = vpack.c.b16 %v817, %v813
    %v878 = vpack.c.b16 %v822, %v818
    %v879 = vpack.c.b16 %v823, %v819
    %v880 = vpack.c.b16 %v824, %v820
    %v881 = vpack.c.b16 %v825, %v821
    %v882 = vpack.c.b16 %v830, %v826
    %v883 = vpack.c.b16 %v831, %v827
    %v884 = vpack.c.b16 %v832, %v828
    %v885 = vpack.c.b16 %v833, %v829
    %v886 = vpack.c.b16 %v838, %v834
    %v887 = vpack.c.b16 %v839, %v835
    %v888 = vpack.c.b16 %v840, %v836
    %v889 = vpack.c.b16 %v841, %v837
    %v890 = vpack.c.b16 %v846, %v842
    %v891 = vpack.c.b16 %v847, %v843
    %v892 = vpack.c.b16 %v848, %v844
    %v893 = vpack.c.b16 %v849, %v845
    %v894 = vpack.c.b16 %v854, %v850
    %v895 = vpack.c.b16 %v855, %v851
    %v896 = vpack.c.b16 %v856, %v852
    %v897 = vpack.c.b16 %v857, %v853
    %v898 = vpack.c.b16 %v862, %v858
    %v899 = vpack.c.b16 %v863, %v859
    %v900 = vpack.c.b16 %v864, %v860
    %v901 = vpack.c.b16 %v865, %v861
    %v902 = vpack.c.b16 %v870, %v866
    %v903 = vpack.c.b16 %v871, %v867
    %v904 = vpack.c.b16 %v872, %v868
    %v905 = vpack.c.b16 %v873, %v869
    %938 = vmatprep.subr.bf16.mxu0 %v903
    %939 = vmatpush1.bf16.xpose.msra.mxu0 %v902
    %940 = vmatprep.subr.bf16.mxu0 %v899
    %941 = vmatpush1.bf16.xpose.msra.mxu0 %v898
    %942 = vmatprep.subr.bf16.mxu0 %v895
    %943 = vmatpush1.bf16.xpose.msra.mxu0 %v894
    %944 = vmatprep.subr.bf16.mxu0 %v891
    %945 = vmatpush1.bf16.xpose.msra.mxu0 %v890
    %946 = vmatprep.subr.bf16.mxu0 %v887
    %947 = vmatpush1.bf16.xpose.msra.mxu0 %v886
    %948 = vmatprep.subr.bf16.mxu0 %v883
    %949 = vmatpush1.bf16.xpose.msra.mxu0 %v882
    %950 = vmatprep.subr.bf16.mxu0 %v879
    %951 = vmatpush1.bf16.xpose.msra.mxu0 %v878
    %952 = vmatprep.subr.bf16.mxu0 %v875
    %953 = vmatpush1.bf16.xpose.msra.mxu0 %v874
    %954 = vmatprep.subr.bf16.mxu0 0
    %955 = vmatpush2.bf16.xpose.msra.mxu0 0
    %956 = vmatprep.subr.bf16.mxu0 0
    %957 = vmatpush2.bf16.xpose.msra.mxu0 0
    %958 = vmatprep.subr.bf16.mxu0 0
    %959 = vmatpush2.bf16.xpose.msra.mxu0 0
    %960 = vmatprep.subr.bf16.mxu0 0
    %961 = vmatpush2.bf16.xpose.msra.mxu0 0
    %962 = vmatprep.subr.bf16.mxu0 0
    %963 = vmatpush2.bf16.xpose.msra.mxu0 0
    %964 = vmatprep.subr.bf16.mxu0 0
    %965 = vmatpush2.bf16.xpose.msra.mxu0 0
    %966 = vmatprep.subr.bf16.mxu0 0
    %967 = vmatpush2.bf16.xpose.msra.mxu0 0
    %968 = vmatprep.subr.bf16.mxu0 0
    %969 = vmatpush2.bf16.xpose.msra.mxu0 0
    %970 = vmatprep.mubr.bf16.mxu0 %v708
    %971 = vmatmul.mubr.bf16.gmra.mxu0 %v707
    %v972 = vpop.f32.mrf.mxu0
    %v973 = vadd.f32 %v776, %v972
    %v974 = vpop.f32.mrf.mxu0
    %v975 = vpop.f32.mrf.mxu0
    %v976 = vadd.f32 %v776, %v975
    %v977 = vpop.f32.mrf.mxu0
    %978 = vmatprep.mubr.bf16.mxu0 %v712
    %979 = vmatmul.mubr.bf16.gmra.mxu0 %v711
    %v980 = vpop.f32.mrf.mxu0
    %v981 = vadd.f32 %v776, %v980
    %v982 = vpop.f32.mrf.mxu0
    %v983 = vpop.f32.mrf.mxu0
    %v984 = vadd.f32 %v776, %v983
    %v985 = vpop.f32.mrf.mxu0
    %986 = vmatprep.mubr.bf16.mxu0 %v716
    %987 = vmatmul.mubr.bf16.gmra.mxu0 %v715
    %v988 = vpop.f32.mrf.mxu0
    %v989 = vadd.f32 %v776, %v988
    %v990 = vpop.f32.mrf.mxu0
    %v991 = vpop.f32.mrf.mxu0
    %v992 = vadd.f32 %v776, %v991
    %v993 = vpop.f32.mrf.mxu0
    %994 = vmatprep.mubr.bf16.mxu0 %v720
    %995 = vmatmul.mubr.bf16.gmra.mxu0 %v719
    %v996 = vpop.f32.mrf.mxu0
    %v997 = vadd.f32 %v776, %v996
    %v998 = vpop.f32.mrf.mxu0
    %v999 = vpop.f32.mrf.mxu0
    %v1000 = vadd.f32 %v776, %v999
    %v1001 = vpop.f32.mrf.mxu0
    %1002 = vmatprep.mubr.bf16.mxu0 %v724
    %1003 = vmatmul.mubr.bf16.gmra.mxu0 %v723
    %v1004 = vpop.f32.mrf.mxu0
    %v1005 = vadd.f32 %v776, %v1004
    %v1006 = vpop.f32.mrf.mxu0
    %v1007 = vpop.f32.mrf.mxu0
    %v1008 = vadd.f32 %v776, %v1007
    %v1009 = vpop.f32.mrf.mxu0
    %1010 = vmatprep.mubr.bf16.mxu0 %v728
    %1011 = vmatmul.mubr.bf16.gmra.mxu0 %v727
    %v1012 = vpop.f32.mrf.mxu0
    %v1013 = vadd.f32 %v776, %v1012
    %v1014 = vpop.f32.mrf.mxu0
    %v1015 = vpop.f32.mrf.mxu0
    %v1016 = vadd.f32 %v776, %v1015
    %v1017 = vpop.f32.mrf.mxu0
    %1018 = vmatprep.mubr.bf16.mxu0 %v732
    %1019 = vmatmul.mubr.bf16.gmra.mxu0 %v731
    %v1020 = vpop.f32.mrf.mxu0
    %v1021 = vadd.f32 %v776, %v1020
    %v1022 = vpop.f32.mrf.mxu0
    %v1023 = vpop.f32.mrf.mxu0
    %v1024 = vadd.f32 %v776, %v1023
    %v1025 = vpop.f32.mrf.mxu0
    %1026 = vmatprep.mubr.bf16.mxu0 %v736
    %1027 = vmatmul.mubr.bf16.gmra.mxu0 %v735
    %v1028 = vpop.f32.mrf.mxu0
    %v1029 = vadd.f32 %v776, %v1028
    %v1030 = vpop.f32.mrf.mxu0
    %v1031 = vpop.f32.mrf.mxu0
    %v1032 = vadd.f32 %v776, %v1031
    %v1033 = vpop.f32.mrf.mxu0
    %1034 = vdwg.mxu0
    %1035 = vmatprep.subr.bf16.mxu0 %v905
    %1036 = vmatpush1.bf16.xpose.msra.mxu0 %v904
    %1037 = vmatprep.subr.bf16.mxu0 %v901
    %1038 = vmatpush1.bf16.xpose.msra.mxu0 %v900
    %1039 = vmatprep.subr.bf16.mxu0 %v897
    %1040 = vmatpush1.bf16.xpose.msra.mxu0 %v896
    %1041 = vmatprep.subr.bf16.mxu0 %v893
    %1042 = vmatpush1.bf16.xpose.msra.mxu0 %v892
    %1043 = vmatprep.subr.bf16.mxu0 %v889
    %1044 = vmatpush1.bf16.xpose.msra.mxu0 %v888
    %1045 = vmatprep.subr.bf16.mxu0 %v885
    %1046 = vmatpush1.bf16.xpose.msra.mxu0 %v884
    %1047 = vmatprep.subr.bf16.mxu0 %v881
    %1048 = vmatpush1.bf16.xpose.msra.mxu0 %v880
    %1049 = vmatprep.subr.bf16.mxu0 %v877
    %1050 = vmatpush1.bf16.xpose.msra.mxu0 %v876
    %1051 = vmatprep.subr.bf16.mxu0 0
    %1052 = vmatpush2.bf16.xpose.msra.mxu0 0
    %1053 = vmatprep.subr.bf16.mxu0 0
    %1054 = vmatpush2.bf16.xpose.msra.mxu0 0
    %1055 = vmatprep.subr.bf16.mxu0 0
    %1056 = vmatpush2.bf16.xpose.msra.mxu0 0
    %1057 = vmatprep.subr.bf16.mxu0 0
    %1058 = vmatpush2.bf16.xpose.msra.mxu0 0
    %1059 = vmatprep.subr.bf16.mxu0 0
    %1060 = vmatpush2.bf16.xpose.msra.mxu0 0
    %1061 = vmatprep.subr.bf16.mxu0 0
    %1062 = vmatpush2.bf16.xpose.msra.mxu0 0
    %1063 = vmatprep.subr.bf16.mxu0 0
    %1064 = vmatpush2.bf16.xpose.msra.mxu0 0
    %1065 = vmatprep.subr.bf16.mxu0 0
    %1066 = vmatpush2.bf16.xpose.msra.mxu0 0
    %1067 = vmatprep.mubr.bf16.mxu0 %v710
    %1068 = vmatmul.mubr.bf16.gmra.mxu0 %v709
    %v1069 = vpop.f32.mrf.mxu0
    %v1070 = vadd.f32 %v973, %v1069
    %v1071 = vpop.f32.mrf.mxu0
    %v1072 = vpop.f32.mrf.mxu0
    %v1073 = vadd.f32 %v976, %v1072
    %v1074 = vpop.f32.mrf.mxu0
    %1075 = vmatprep.mubr.bf16.mxu0 %v714
    %1076 = vmatmul.mubr.bf16.gmra.mxu0 %v713
    %v1077 = vpop.f32.mrf.mxu0
    %v1078 = vadd.f32 %v981, %v1077
    %v1079 = vpop.f32.mrf.mxu0
    %v1080 = vpop.f32.mrf.mxu0
    %v1081 = vadd.f32 %v984, %v1080
    %v1082 = vpop.f32.mrf.mxu0
    %1083 = vmatprep.mubr.bf16.mxu0 %v718
    %1084 = vmatmul.mubr.bf16.gmra.mxu0 %v717
    %v1085 = vpop.f32.mrf.mxu0
    %v1086 = vadd.f32 %v989, %v1085
    %v1087 = vpop.f32.mrf.mxu0
    %v1088 = vpop.f32.mrf.mxu0
    %v1089 = vadd.f32 %v992, %v1088
    %v1090 = vpop.f32.mrf.mxu0
    %1091 = vmatprep.mubr.bf16.mxu0 %v722
    %1092 = vmatmul.mubr.bf16.gmra.mxu0 %v721
    %v1093 = vpop.f32.mrf.mxu0
    %v1094 = vadd.f32 %v997, %v1093
    %v1095 = vpop.f32.mrf.mxu0
    %v1096 = vpop.f32.mrf.mxu0
    %v1097 = vadd.f32 %v1000, %v1096
    %v1098 = vpop.f32.mrf.mxu0
    %1099 = vmatprep.mubr.bf16.mxu0 %v726
    %1100 = vmatmul.mubr.bf16.gmra.mxu0 %v725
    %v1101 = vpop.f32.mrf.mxu0
    %v1102 = vadd.f32 %v1005, %v1101
    %v1103 = vpop.f32.mrf.mxu0
    %v1104 = vpop.f32.mrf.mxu0
    %v1105 = vadd.f32 %v1008, %v1104
    %v1106 = vpop.f32.mrf.mxu0
    %1107 = vmatprep.mubr.bf16.mxu0 %v730
    %1108 = vmatmul.mubr.bf16.gmra.mxu0 %v729
    %v1109 = vpop.f32.mrf.mxu0
    %v1110 = vadd.f32 %v1013, %v1109
    %v1111 = vpop.f32.mrf.mxu0
    %v1112 = vpop.f32.mrf.mxu0
    %v1113 = vadd.f32 %v1016, %v1112
    %v1114 = vpop.f32.mrf.mxu0
    %1115 = vmatprep.mubr.bf16.mxu0 %v734
    %1116 = vmatmul.mubr.bf16.gmra.mxu0 %v733
    %v1117 = vpop.f32.mrf.mxu0
    %v1118 = vadd.f32 %v1021, %v1117
    %v1119 = vpop.f32.mrf.mxu0
    %v1120 = vpop.f32.mrf.mxu0
    %v1121 = vadd.f32 %v1024, %v1120
    %v1122 = vpop.f32.mrf.mxu0
    %1123 = vmatprep.mubr.bf16.mxu0 %v738
    %1124 = vmatmul.mubr.bf16.gmra.mxu0 %v737
    %v1125 = vpop.f32.mrf.mxu0
    %v1126 = vadd.f32 %v1029, %v1125
    %v1127 = vpop.f32.mrf.mxu0
    %v1128 = vpop.f32.mrf.mxu0
    %v1129 = vadd.f32 %v1032, %v1128
    %v1130 = vpop.f32.mrf.mxu0
    %1131 = vdwg.mxu0
    %1132 = vst [vmem:[#allocation10] sm:$0xff] %v1070
    %1133 = vst [vmem:[#allocation10 + $0x8] sm:$0xff] %v1073
    %1134 = vst [vmem:[#allocation10 + $0x10] sm:$0xff] %v1078
    %1135 = vst [vmem:[#allocation10 + $0x18] sm:$0xff] %v1081
    %1136 = vst [vmem:[#allocation10 + $0x20] sm:$0xff] %v1086
    %1137 = vst [vmem:[#allocation10 + $0x28] sm:$0xff] %v1089
    %1138 = vst [vmem:[#allocation10 + $0x30] sm:$0xff] %v1094
    %1139 = vst [vmem:[#allocation10 + $0x38] sm:$0xff] %v1097
    %1140 = vst [vmem:[#allocation10 + $0x40] sm:$0xff] %v1102
    %1141 = vst [vmem:[#allocation10 + $0x48] sm:$0xff] %v1105
    %1142 = vst [vmem:[#allocation10 + $0x50] sm:$0xff] %v1110
    %1143 = vst [vmem:[#allocation10 + $0x58] sm:$0xff] %v1113
    %1144 = vst [vmem:[#allocation10 + $0x60] sm:$0xff] %v1118
    %1145 = vst [vmem:[#allocation10 + $0x68] sm:$0xff] %v1121
    %1146 = vst [vmem:[#allocation10 + $0x70] sm:$0xff] %v1126
    %1147 = vst [vmem:[#allocation10 + $0x78] sm:$0xff] %v1129
    // Predicated region
    $region38: #{tpu_custom_call.1} parent=1 // pred_check
      _
    $region39: #{tpu_custom_call.1} parent=1 // pred_check_branch
      %1149 = sbr.rel (0) target = $region41
    $region40: #{tpu_custom_call.1} parent=1 // pred_region
      %s1151 = ssub.s32 2048, 2048
      %1152 = vsyncadd [#allocation4], %s1151
      %s1153 = sshll.u32 [#allocation10], 4
      %s1154 = int_to_ptr.vmem [resolvable:$true] %s1153
      %1159 = dma.vmem_to_hbm [thread:$0]  %s1154, 2048, %s5, [#allocation4], 128, 128, 8
    $region41: #{tpu_custom_call.1} parent=1 // pred_fallthru
      _
    // Predicated region
    $region42: #{tpu_custom_call.1} parent=1 // pred_check
      _
    $region43: #{tpu_custom_call.1} parent=1 // pred_check_branch
      %1161 = sbr.rel (0) target = $region45
    $region44: #{tpu_custom_call.1} parent=1 // pred_region
      %1162 = dma.done [#allocation4], 2048
    $region45: #{tpu_custom_call.1} parent=1 // pred_fallthru
      _
    %1163 = vsyncpa [#allocation3], 1
    %1164 = vsyncpa [#allocation6], 1
    %1165 = vsyncpa [#allocation9], 1
    %1166 = vsyncpa [#allocation4], 1

</llo_original>
